<compile_context>
chip_gen: v7x
topology: tpu7x:2x2x1
jax: 0.10.0
libtpu: 0.0.40
codegen_flags: <defaults>
</compile_context>

<pallas_src>
import functools

import jax
import jax.numpy as jnp
from jax.experimental import pallas as pl
from jax.experimental.pallas import tpu as pltpu


# ---------------------------------------------------------------------------
# Pass 1: channel max / sum (C-tiled reduction) + 5x5 conv + sigmoid -> y(N,H,W)
# ---------------------------------------------------------------------------
def _pool_conv_kernel(H, W, K, w_ref, x_ref, y_ref, mx_ref, sm_ref, pad_ref):
    # w_ref : SMEM f32[2*K*K]   flattened conv weight; avg-channel weights are
    #                           pre-scaled by 1/C in the wrapper (mean folding).
    # x_ref : VMEM [1, tc, H, W] current channel tile of one batch element.
    # y_ref : VMEM [1, H, W]     attention map output (written at last C step).
    # mx_ref, sm_ref : VMEM [H, W] running channel max / channel sum.
    # pad_ref: VMEM [2, H+2P, W+2P] zero-padded pooled maps for the conv.
    P = (K - 1) // 2
    ci = pl.program_id(1)
    last = pl.num_programs(1) - 1

    xb = x_ref[0].astype(jnp.float32)            # (tc, H, W), f32 accumulation
    blk_max = jnp.max(xb, axis=0)                # (H, W)
    blk_sum = jnp.sum(xb, axis=0)                # (H, W)

    @pl.when(ci == 0)
    def _():
        # Border of pad_ref must be zero; the interior is fully rewritten below,
        # so this runs only once per batch element (scratch persists across ci).
        pad_ref[...] = jnp.zeros((2, H + 2 * P, W + 2 * P), jnp.float32)
        mx_ref[...] = jnp.full((H, W), -jnp.inf, jnp.float32)
        sm_ref[...] = jnp.zeros((H, W), jnp.float32)

    mx_ref[...] = jnp.maximum(mx_ref[...], blk_max)
    sm_ref[...] = sm_ref[...] + blk_sum

    @pl.when(ci == last)
    def _():
        pad_ref[0, P:P + H, P:P + W] = mx_ref[...]
        pad_ref[1, P:P + H, P:P + W] = sm_ref[...]     # sum; 1/C folded into weights

        acc = jnp.zeros((H, W), jnp.float32)
        for ki in range(K):
            # One sublane-shifted row band per (channel, ki); horizontal taps are
            # in-register lane shifts of the band (avoids 2*K*K unaligned VMEM slices).
            band_mx = pad_ref[0, ki:ki + H, :]          # (H, W + 2P)
            band_sm = pad_ref[1, ki:ki + H, :]
            for kj in range(K):
                acc = acc + w_ref[ki * K + kj] * band_mx[:, kj:kj + W]
                acc = acc + w_ref[K * K + ki * K + kj] * band_sm[:, kj:kj + W]

        y_ref[0] = jax.nn.sigmoid(acc)


# ---------------------------------------------------------------------------
# Pass 2: lane-dense broadcast multiply  out[n, c, hw] = x[n, c, hw] * y[n, hw]
# ---------------------------------------------------------------------------
def _mul_kernel(x_ref, y_ref, o_ref):
    o_ref[...] = (x_ref[...] * y_ref[...]).astype(o_ref.dtype)


# ---------------------------------------------------------------------------
# Tile pickers (keep blocks VMEM-friendly and (8,128)-legal)
# ---------------------------------------------------------------------------
def _pick_channel_tile(C, hw, budget_bytes=4 << 20):
    """Largest divisor of C with tile*hw*4 bytes within budget (>=1)."""
    best = 1
    for d in range(1, C + 1):
        if C % d == 0 and d * hw * 4 <= budget_bytes:
            best = d
    return best


def _pick_lane_tile(hw, max_tile=2048):
    """Largest 128-aligned divisor of hw <= max_tile, else full extent."""
    if hw <= max_tile:
        return hw
    best = hw
    d = 128
    while d <= max_tile:
        if hw % d == 0:
            best = d
        d += 128
    return best


def _pick_sublane_tile(C, lane_tile, itemsize, budget_bytes=2 << 20):
    """Largest 8-aligned divisor of C keeping a block within budget, else full C."""
    max_c = max(1, budget_bytes // max(1, lane_tile * itemsize))
    if C <= max_c:
        return C
    best = C
    d = 8
    while d <= max_c:
        if C % d == 0:
            best = d
        d += 8
    return best


# ---------------------------------------------------------------------------
# Wrapper
# ---------------------------------------------------------------------------
def sa_layer(x, w):
    """x: (N, C, H, W); w: (1, 2, K, K) Conv2d weight (OIHW, bias=False)."""
    N, C, H, W = x.shape
    K = w.shape[-1]
    P = (K - 1) // 2
    HW = H * W

    # Flatten weights; fold the mean's 1/C into the avg-channel weights.
    w32 = w.astype(jnp.float32).reshape(2, K, K)
    w_flat = jnp.concatenate([w32[0].reshape(-1), (w32[1] / C).reshape(-1)])

    # ---- Pass 1: pooled maps + conv + sigmoid -> y (N, H, W) f32 -------------
    tc_pool = _pick_channel_tile(C, HW)
    y = pl.pallas_call(
        functools.partial(_pool_conv_kernel, H, W, K),
        out_shape=jax.ShapeDtypeStruct((N, H, W), jnp.float32),
        grid_spec=pltpu.PrefetchScalarGridSpec(
            num_scalar_prefetch=1,                      # conv weights in SMEM
            grid=(N, C // tc_pool),
            in_specs=[pl.BlockSpec((1, tc_pool, H, W),
                                   lambda n, ci, w_s: (n, ci, 0, 0))],
            out_specs=pl.BlockSpec((1, H, W), lambda n, ci, w_s: (n, 0, 0)),
            scratch_shapes=[pltpu.VMEM((H, W), jnp.float32),              # running max
                            pltpu.VMEM((H, W), jnp.float32),              # running sum
                            pltpu.VMEM((2, H + 2 * P, W + 2 * P), jnp.float32)],
        ),
        compiler_params=pltpu.CompilerParams(
            dimension_semantics=("parallel", "arbitrary")),
    )(w_flat, x)

    # ---- Pass 2: lane-dense elementwise multiply -----------------------------
    x2 = x.reshape(N, C, HW)        # free metadata reshape (contiguous NCHW)
    y2 = y.reshape(N, 1, HW)        # free metadata reshape
    thw = _pick_lane_tile(HW)
    tc = _pick_sublane_tile(C, thw, x.dtype.itemsize)

    out = pl.pallas_call(
        _mul_kernel,
        out_shape=jax.ShapeDtypeStruct((N, C, HW), x.dtype),
        grid=(N, C // tc, HW // thw),
        in_specs=[pl.BlockSpec((1, tc, thw), lambda n, c, h: (n, c, h)),
                  pl.BlockSpec((1, 1, thw), lambda n, c, h: (n, 0, h))],
        out_specs=pl.BlockSpec((1, tc, thw), lambda n, c, h: (n, c, h)),
        compiler_params=pltpu.CompilerParams(
            dimension_semantics=("parallel", "parallel", "parallel")),
    )(x2, y2)

    return out.reshape(N, C, H, W)


def sa_layer_ref(x, w):
    """Pure-JAX reference of the PyTorch forward."""
    mx = jnp.max(x, axis=1, keepdims=True)
    avg = jnp.mean(x, axis=1, keepdims=True)
    cp = jnp.concatenate([mx, avg], axis=1)
    P = (w.shape[-1] - 1) // 2
    y = jax.lax.conv_general_dilated(
        cp, w, window_strides=(1, 1), padding=((P, P), (P, P)),
        dimension_numbers=("NCHW", "OIHW", "NCHW"))
    return x * jax.nn.sigmoid(y)


if __name__ == "__main__":
    key = jax.random.PRNGKey(0)
    k_x, k_w = jax.random.split(key)

    N, C, H, W = 2, 4, 16, 16
    K = 5

    x = jax.random.normal(k_x, (N, C, H, W), dtype=jnp.float32)
    # Deterministic Conv2d(2, 1, kernel_size=5, bias=False) weight, OIHW.
    w = jax.random.normal(k_w, (1, 2, K, K), dtype=jnp.float32) * 0.1

    out = jax.block_until_ready(sa_layer(x, w))
    ref = jax.block_until_ready(sa_layer_ref(x, w))

    assert out.shape == (N, C, H, W)
    err = float(jnp.max(jnp.abs(out - ref)))
    assert jnp.allclose(out, ref, atol=1e-5, rtol=1e-5), err
    print("KERNEL_OK")
</pallas_src>

<mosaic_0001>
module attributes {stable_mosaic.version = 11 : i64} {
  func.func @_pool_conv_kernel(%arg0: i32, %arg1: i32, %arg2: memref<50xf32, #tpu.memory_space<smem>>, %arg3: memref<1x4x16x16xf32, #tpu.memory_space<vmem>>, %arg4: memref<1x16x16xf32, #tpu.memory_space<vmem>>, %arg5: memref<16x16xf32, #tpu.memory_space<vmem>>, %arg6: memref<16x16xf32, #tpu.memory_space<vmem>>, %arg7: memref<2x20x20xf32, #tpu.memory_space<vmem>>) attributes {dimension_semantics = [#tpu.dimension_semantics<parallel>, #tpu.dimension_semantics<arbitrary>], iteration_bounds = array<i64: 2, 1>, scalar_prefetch = 1 : i64, scratch_operands = 3 : i64, tpu.core_type = #tpu.core_type<tc>, window_params = [{transform_indices = @transform_0, window_bounds = array<i64: 1, 4, 16, 16>}, {transform_indices = @transform_1, window_bounds = array<i64: 1, 16, 16>}]} {
    %c0 = arith.constant 0 : index
    %c0_0 = arith.constant 0 : index
    %c0_1 = arith.constant 0 : index
    %c0_2 = arith.constant 0 : index
    %0 = vector.load %arg3[%c0, %c0_0, %c0_1, %c0_2] : memref<1x4x16x16xf32, #tpu.memory_space<vmem>>, vector<1x4x16x16xf32>
    %1 = vector.shape_cast %0 : vector<1x4x16x16xf32> to vector<4x16x16xf32>
    %cst = arith.constant dense<0xFF800000> : vector<16x16xf32>
    %2 = vector.multi_reduction <maximumf>, %1, %cst [0] : vector<4x16x16xf32> to vector<16x16xf32>
    %cst_3 = arith.constant dense<0.000000e+00> : vector<16x16xf32>
    %3 = vector.multi_reduction <add>, %1, %cst_3 [0] : vector<4x16x16xf32> to vector<16x16xf32>
    %c0_i32 = arith.constant 0 : i32
    %4 = arith.cmpi eq, %arg1, %c0_i32 : i32
    %5 = arith.extui %4 : i1 to i32
    %c0_i32_4 = arith.constant 0 : i32
    %6 = arith.cmpi ne, %5, %c0_i32_4 : i32
    scf.if %6 {
      %cst_15 = arith.constant 0.000000e+00 : f32
      %16 = vector.broadcast %cst_15 : f32 to vector<2x20x20xf32>
      %c0_16 = arith.constant 0 : index
      %c0_17 = arith.constant 0 : index
      %c0_18 = arith.constant 0 : index
      %17 = vector.load %arg7[%c0_16, %c0_17, %c0_18] : memref<2x20x20xf32, #tpu.memory_space<vmem>>, vector<2x20x20xf32>
      tpu.vector_store %arg7[%c0_16, %c0_17, %c0_18], %16 {strides = array<i32>} : memref<2x20x20xf32, #tpu.memory_space<vmem>>, vector<2x20x20xf32>,
      %cst_19 = arith.constant 0xFF800000 : f32
      %18 = vector.broadcast %cst_19 : f32 to vector<16x16xf32>
      %c0_20 = arith.constant 0 : index
      %c0_21 = arith.constant 0 : index
      %19 = vector.load %arg5[%c0_20, %c0_21] : memref<16x16xf32, #tpu.memory_space<vmem>>, vector<16x16xf32>
      tpu.vector_store %arg5[%c0_20, %c0_21], %18 {strides = array<i32>} : memref<16x16xf32, #tpu.memory_space<vmem>>, vector<16x16xf32>,
      %cst_22 = arith.constant 0.000000e+00 : f32
      %20 = vector.broadcast %cst_22 : f32 to vector<16x16xf32>
      %c0_23 = arith.constant 0 : index
      %c0_24 = arith.constant 0 : index
      %21 = vector.load %arg6[%c0_23, %c0_24] : memref<16x16xf32, #tpu.memory_space<vmem>>, vector<16x16xf32>
      tpu.vector_store %arg6[%c0_23, %c0_24], %20 {strides = array<i32>} : memref<16x16xf32, #tpu.memory_space<vmem>>, vector<16x16xf32>,
    } else {
    }
    %c0_5 = arith.constant 0 : index
    %c0_6 = arith.constant 0 : index
    %7 = vector.load %arg5[%c0_5, %c0_6] : memref<16x16xf32, #tpu.memory_space<vmem>>, vector<16x16xf32>
    %8 = arith.maximumf %7, %2 : vector<16x16xf32>
    %c0_7 = arith.constant 0 : index
    %c0_8 = arith.constant 0 : index
    %9 = vector.load %arg5[%c0_7, %c0_8] : memref<16x16xf32, #tpu.memory_space<vmem>>, vector<16x16xf32>
    tpu.vector_store %arg5[%c0_7, %c0_8], %8 {strides = array<i32>} : memref<16x16xf32, #tpu.memory_space<vmem>>, vector<16x16xf32>,
    %c0_9 = arith.constant 0 : index
    %c0_10 = arith.constant 0 : index
    %10 = vector.load %arg6[%c0_9, %c0_10] : memref<16x16xf32, #tpu.memory_space<vmem>>, vector<16x16xf32>
    %11 = arith.addf %10, %3 : vector<16x16xf32>
    %c0_11 = arith.constant 0 : index
    %c0_12 = arith.constant 0 : index
    %12 = vector.load %arg6[%c0_11, %c0_12] : memref<16x16xf32, #tpu.memory_space<vmem>>, vector<16x16xf32>
    tpu.vector_store %arg6[%c0_11, %c0_12], %11 {strides = array<i32>} : memref<16x16xf32, #tpu.memory_space<vmem>>, vector<16x16xf32>,
    %c0_i32_13 = arith.constant 0 : i32
    %13 = arith.cmpi eq, %arg1, %c0_i32_13 : i32
    %14 = arith.extui %13 : i1 to i32
    %c0_i32_14 = arith.constant 0 : i32
    %15 = arith.cmpi ne, %14, %c0_i32_14 : i32
    scf.if %15 {
      %c0_15 = arith.constant 0 : index
      %c0_16 = arith.constant 0 : index
      %16 = vector.load %arg5[%c0_15, %c0_16] : memref<16x16xf32, #tpu.memory_space<vmem>>, vector<16x16xf32>
      %c0_17 = arith.constant 0 : index
      %c2 = arith.constant 2 : index
      %c2_18 = arith.constant 2 : index
      %17 = vector.load %arg7[%c0_17, %c2, %c2_18] : memref<2x20x20xf32, #tpu.memory_space<vmem>>, vector<1x16x16xf32>
      %18 = vector.shape_cast %17 : vector<1x16x16xf32> to vector<16x16xf32>
      %19 = vector.shape_cast %16 : vector<16x16xf32> to vector<1x16x16xf32>
      tpu.vector_store %arg7[%c0_17, %c2, %c2_18], %19 {strides = array<i32>} : memref<2x20x20xf32, #tpu.memory_space<vmem>>, vector<1x16x16xf32>,
      %c0_19 = arith.constant 0 : index
      %c0_20 = arith.constant 0 : index
      %20 = vector.load %arg6[%c0_19, %c0_20] : memref<16x16xf32, #tpu.memory_space<vmem>>, vector<16x16xf32>
      %c1 = arith.constant 1 : index
      %c2_21 = arith.constant 2 : index
      %c2_22 = arith.constant 2 : index
      %21 = vector.load %arg7[%c1, %c2_21, %c2_22] : memref<2x20x20xf32, #tpu.memory_space<vmem>>, vector<1x16x16xf32>
      %22 = vector.shape_cast %21 : vector<1x16x16xf32> to vector<16x16xf32>
      %23 = vector.shape_cast %20 : vector<16x16xf32> to vector<1x16x16xf32>
      tpu.vector_store %arg7[%c1, %c2_21, %c2_22], %23 {strides = array<i32>} : memref<2x20x20xf32, #tpu.memory_space<vmem>>, vector<1x16x16xf32>,
      %cst_23 = arith.constant 0.000000e+00 : f32
      %24 = vector.broadcast %cst_23 : f32 to vector<16x16xf32>
      %c0_24 = arith.constant 0 : index
      %c0_25 = arith.constant 0 : index
      %c0_26 = arith.constant 0 : index
      %25 = vector.load %arg7[%c0_24, %c0_25, %c0_26] : memref<2x20x20xf32, #tpu.memory_space<vmem>>, vector<1x16x20xf32>
      %26 = vector.shape_cast %25 : vector<1x16x20xf32> to vector<16x20xf32>
      %c1_27 = arith.constant 1 : index
      %c0_28 = arith.constant 0 : index
      %c0_29 = arith.constant 0 : index
      %27 = vector.load %arg7[%c1_27, %c0_28, %c0_29] : memref<2x20x20xf32, #tpu.memory_space<vmem>>, vector<1x16x20xf32>
      %28 = vector.shape_cast %27 : vector<1x16x20xf32> to vector<16x20xf32>
      %c0_30 = arith.constant 0 : index
      %29 = memref.load %arg2[%c0_30] : memref<50xf32, #tpu.memory_space<smem>>
      %30 = vector.extract_strided_slice %26 {offsets = [0, 0], sizes = [16, 16], strides = [1, 1]} : vector<16x20xf32> to vector<16x16xf32>
      %31 = vector.broadcast %29 : f32 to vector<16x16xf32>
      %32 = arith.mulf %31, %30 : vector<16x16xf32>
      %33 = arith.addf %24, %32 : vector<16x16xf32>
      %c25 = arith.constant 25 : index
      %34 = memref.load %arg2[%c25] : memref<50xf32, #tpu.memory_space<smem>>
      %35 = vector.extract_strided_slice %28 {offsets = [0, 0], sizes = [16, 16], strides = [1, 1]} : vector<16x20xf32> to vector<16x16xf32>
      %36 = vector.broadcast %34 : f32 to vector<16x16xf32>
      %37 = arith.mulf %36, %35 : vector<16x16xf32>
      %38 = arith.addf %33, %37 : vector<16x16xf32>
      %c1_31 = arith.constant 1 : index
      %39 = memref.load %arg2[%c1_31] : memref<50xf32, #tpu.memory_space<smem>>
      %40 = vector.extract_strided_slice %26 {offsets = [0, 1], sizes = [16, 16], strides = [1, 1]} : vector<16x20xf32> to vector<16x16xf32>
      %41 = vector.broadcast %39 : f32 to vector<16x16xf32>
      %42 = arith.mulf %41, %40 : vector<16x16xf32>
      %43 = arith.addf %38, %42 : vector<16x16xf32>
      %c26 = arith.constant 26 : index
      %44 = memref.load %arg2[%c26] : memref<50xf32, #tpu.memory_space<smem>>
      %45 = vector.extract_strided_slice %28 {offsets = [0, 1], sizes = [16, 16], strides = [1, 1]} : vector<16x20xf32> to vector<16x16xf32>
      %46 = vector.broadcast %44 : f32 to vector<16x16xf32>
      %47 = arith.mulf %46, %45 : vector<16x16xf32>
      %48 = arith.addf %43, %47 : vector<16x16xf32>
      %c2_32 = arith.constant 2 : index
      %49 = memref.load %arg2[%c2_32] : memref<50xf32, #tpu.memory_space<smem>>
      %50 = vector.extract_strided_slice %26 {offsets = [0, 2], sizes = [16, 16], strides = [1, 1]} : vector<16x20xf32> to vector<16x16xf32>
      %51 = vector.broadcast %49 : f32 to vector<16x16xf32>
      %52 = arith.mulf %51, %50 : vector<16x16xf32>
      %53 = arith.addf %48, %52 : vector<16x16xf32>
      %c27 = arith.constant 27 : index
      %54 = memref.load %arg2[%c27] : memref<50xf32, #tpu.memory_space<smem>>
      %55 = vector.extract_strided_slice %28 {offsets = [0, 2], sizes = [16, 16], strides = [1, 1]} : vector<16x20xf32> to vector<16x16xf32>
      %56 = vector.broadcast %54 : f32 to vector<16x16xf32>
      %57 = arith.mulf %56, %55 : vector<16x16xf32>
      %58 = arith.addf %53, %57 : vector<16x16xf32>
      %c3 = arith.constant 3 : index
      %59 = memref.load %arg2[%c3] : memref<50xf32, #tpu.memory_space<smem>>
      %60 = vector.extract_strided_slice %26 {offsets = [0, 3], sizes = [16, 16], strides = [1, 1]} : vector<16x20xf32> to vector<16x16xf32>
      %61 = vector.broadcast %59 : f32 to vector<16x16xf32>
      %62 = arith.mulf %61, %60 : vector<16x16xf32>
      %63 = arith.addf %58, %62 : vector<16x16xf32>
      %c28 = arith.constant 28 : index
      %64 = memref.load %arg2[%c28] : memref<50xf32, #tpu.memory_space<smem>>
      %65 = vector.extract_strided_slice %28 {offsets = [0, 3], sizes = [16, 16], strides = [1, 1]} : vector<16x20xf32> to vector<16x16xf32>
      %66 = vector.broadcast %64 : f32 to vector<16x16xf32>
      %67 = arith.mulf %66, %65 : vector<16x16xf32>
      %68 = arith.addf %63, %67 : vector<16x16xf32>
      %c4 = arith.constant 4 : index
      %69 = memref.load %arg2[%c4] : memref<50xf32, #tpu.memory_space<smem>>
      %70 = vector.extract_strided_slice %26 {offsets = [0, 4], sizes = [16, 16], strides = [1, 1]} : vector<16x20xf32> to vector<16x16xf32>
      %71 = vector.broadcast %69 : f32 to vector<16x16xf32>
      %72 = arith.mulf %71, %70 : vector<16x16xf32>
      %73 = arith.addf %68, %72 : vector<16x16xf32>
      %c29 = arith.constant 29 : index
      %74 = memref.load %arg2[%c29] : memref<50xf32, #tpu.memory_space<smem>>
      %75 = vector.extract_strided_slice %28 {offsets = [0, 4], sizes = [16, 16], strides = [1, 1]} : vector<16x20xf32> to vector<16x16xf32>
      %76 = vector.broadcast %74 : f32 to vector<16x16xf32>
      %77 = arith.mulf %76, %75 : vector<16x16xf32>
      %78 = arith.addf %73, %77 : vector<16x16xf32>
      %c0_33 = arith.constant 0 : index
      %c1_34 = arith.constant 1 : index
      %c0_35 = arith.constant 0 : index
      %79 = vector.load %arg7[%c0_33, %c1_34, %c0_35] : memref<2x20x20xf32, #tpu.memory_space<vmem>>, vector<1x16x20xf32>
      %80 = vector.shape_cast %79 : vector<1x16x20xf32> to vector<16x20xf32>
      %c1_36 = arith.constant 1 : index
      %c1_37 = arith.constant 1 : index
      %c0_38 = arith.constant 0 : index
      %81 = vector.load %arg7[%c1_36, %c1_37, %c0_38] : memref<2x20x20xf32, #tpu.memory_space<vmem>>, vector<1x16x20xf32>
      %82 = vector.shape_cast %81 : vector<1x16x20xf32> to vector<16x20xf32>
      %c5 = arith.constant 5 : index
      %83 = memref.load %arg2[%c5] : memref<50xf32, #tpu.memory_space<smem>>
      %84 = vector.extract_strided_slice %80 {offsets = [0, 0], sizes = [16, 16], strides = [1, 1]} : vector<16x20xf32> to vector<16x16xf32>
      %85 = vector.broadcast %83 : f32 to vector<16x16xf32>
      %86 = arith.mulf %85, %84 : vector<16x16xf32>
      %87 = arith.addf %78, %86 : vector<16x16xf32>
      %c30 = arith.constant 30 : index
      %88 = memref.load %arg2[%c30] : memref<50xf32, #tpu.memory_space<smem>>
      %89 = vector.extract_strided_slice %82 {offsets = [0, 0], sizes = [16, 16], strides = [1, 1]} : vector<16x20xf32> to vector<16x16xf32>
      %90 = vector.broadcast %88 : f32 to vector<16x16xf32>
      %91 = arith.mulf %90, %89 : vector<16x16xf32>
      %92 = arith.addf %87, %91 : vector<16x16xf32>
      %c6 = arith.constant 6 : index
      %93 = memref.load %arg2[%c6] : memref<50xf32, #tpu.memory_space<smem>>
      %94 = vector.extract_strided_slice %80 {offsets = [0, 1], sizes = [16, 16], strides = [1, 1]} : vector<16x20xf32> to vector<16x16xf32>
      %95 = vector.broadcast %93 : f32 to vector<16x16xf32>
      %96 = arith.mulf %95, %94 : vector<16x16xf32>
      %97 = arith.addf %92, %96 : vector<16x16xf32>
      %c31 = arith.constant 31 : index
      %98 = memref.load %arg2[%c31] : memref<50xf32, #tpu.memory_space<smem>>
      %99 = vector.extract_strided_slice %82 {offsets = [0, 1], sizes = [16, 16], strides = [1, 1]} : vector<16x20xf32> to vector<16x16xf32>
      %100 = vector.broadcast %98 : f32 to vector<16x16xf32>
      %101 = arith.mulf %100, %99 : vector<16x16xf32>
      %102 = arith.addf %97, %101 : vector<16x16xf32>
      %c7 = arith.constant 7 : index
      %103 = memref.load %arg2[%c7] : memref<50xf32, #tpu.memory_space<smem>>
      %104 = vector.extract_strided_slice %80 {offsets = [0, 2], sizes = [16, 16], strides = [1, 1]} : vector<16x20xf32> to vector<16x16xf32>
      %105 = vector.broadcast %103 : f32 to vector<16x16xf32>
      %106 = arith.mulf %105, %104 : vector<16x16xf32>
      %107 = arith.addf %102, %106 : vector<16x16xf32>
      %c32 = arith.constant 32 : index
      %108 = memref.load %arg2[%c32] : memref<50xf32, #tpu.memory_space<smem>>
      %109 = vector.extract_strided_slice %82 {offsets = [0, 2], sizes = [16, 16], strides = [1, 1]} : vector<16x20xf32> to vector<16x16xf32>
      %110 = vector.broadcast %108 : f32 to vector<16x16xf32>
      %111 = arith.mulf %110, %109 : vector<16x16xf32>
      %112 = arith.addf %107, %111 : vector<16x16xf32>
      %c8 = arith.constant 8 : index
      %113 = memref.load %arg2[%c8] : memref<50xf32, #tpu.memory_space<smem>>
      %114 = vector.extract_strided_slice %80 {offsets = [0, 3], sizes = [16, 16], strides = [1, 1]} : vector<16x20xf32> to vector<16x16xf32>
      %115 = vector.broadcast %113 : f32 to vector<16x16xf32>
      %116 = arith.mulf %115, %114 : vector<16x16xf32>
      %117 = arith.addf %112, %116 : vector<16x16xf32>
      %c33 = arith.constant 33 : index
      %118 = memref.load %arg2[%c33] : memref<50xf32, #tpu.memory_space<smem>>
      %119 = vector.extract_strided_slice %82 {offsets = [0, 3], sizes = [16, 16], strides = [1, 1]} : vector<16x20xf32> to vector<16x16xf32>
      %120 = vector.broadcast %118 : f32 to vector<16x16xf32>
      %121 = arith.mulf %120, %119 : vector<16x16xf32>
      %122 = arith.addf %117, %121 : vector<16x16xf32>
      %c9 = arith.constant 9 : index
      %123 = memref.load %arg2[%c9] : memref<50xf32, #tpu.memory_space<smem>>
      %124 = vector.extract_strided_slice %80 {offsets = [0, 4], sizes = [16, 16], strides = [1, 1]} : vector<16x20xf32> to vector<16x16xf32>
      %125 = vector.broadcast %123 : f32 to vector<16x16xf32>
      %126 = arith.mulf %125, %124 : vector<16x16xf32>
      %127 = arith.addf %122, %126 : vector<16x16xf32>
      %c34 = arith.constant 34 : index
      %128 = memref.load %arg2[%c34] : memref<50xf32, #tpu.memory_space<smem>>
      %129 = vector.extract_strided_slice %82 {offsets = [0, 4], sizes = [16, 16], strides = [1, 1]} : vector<16x20xf32> to vector<16x16xf32>
      %130 = vector.broadcast %128 : f32 to vector<16x16xf32>
      %131 = arith.mulf %130, %129 : vector<16x16xf32>
      %132 = arith.addf %127, %131 : vector<16x16xf32>
      %c0_39 = arith.constant 0 : index
      %c2_40 = arith.constant 2 : index
      %c0_41 = arith.constant 0 : index
      %133 = vector.load %arg7[%c0_39, %c2_40, %c0_41] : memref<2x20x20xf32, #tpu.memory_space<vmem>>, vector<1x16x20xf32>
      %134 = vector.shape_cast %133 : vector<1x16x20xf32> to vector<16x20xf32>
      %c1_42 = arith.constant 1 : index
      %c2_43 = arith.constant 2 : index
      %c0_44 = arith.constant 0 : index
      %135 = vector.load %arg7[%c1_42, %c2_43, %c0_44] : memref<2x20x20xf32, #tpu.memory_space<vmem>>, vector<1x16x20xf32>
      %136 = vector.shape_cast %135 : vector<1x16x20xf32> to vector<16x20xf32>
      %c10 = arith.constant 10 : index
      %137 = memref.load %arg2[%c10] : memref<50xf32, #tpu.memory_space<smem>>
      %138 = vector.extract_strided_slice %134 {offsets = [0, 0], sizes = [16, 16], strides = [1, 1]} : vector<16x20xf32> to vector<16x16xf32>
      %139 = vector.broadcast %137 : f32 to vector<16x16xf32>
      %140 = arith.mulf %139, %138 : vector<16x16xf32>
      %141 = arith.addf %132, %140 : vector<16x16xf32>
      %c35 = arith.constant 35 : index
      %142 = memref.load %arg2[%c35] : memref<50xf32, #tpu.memory_space<smem>>
      %143 = vector.extract_strided_slice %136 {offsets = [0, 0], sizes = [16, 16], strides = [1, 1]} : vector<16x20xf32> to vector<16x16xf32>
      %144 = vector.broadcast %142 : f32 to vector<16x16xf32>
      %145 = arith.mulf %144, %143 : vector<16x16xf32>
      %146 = arith.addf %141, %145 : vector<16x16xf32>
      %c11 = arith.constant 11 : index
      %147 = memref.load %arg2[%c11] : memref<50xf32, #tpu.memory_space<smem>>
      %148 = vector.extract_strided_slice %134 {offsets = [0, 1], sizes = [16, 16], strides = [1, 1]} : vector<16x20xf32> to vector<16x16xf32>
      %149 = vector.broadcast %147 : f32 to vector<16x16xf32>
      %150 = arith.mulf %149, %148 : vector<16x16xf32>
      %151 = arith.addf %146, %150 : vector<16x16xf32>
      %c36 = arith.constant 36 : index
      %152 = memref.load %arg2[%c36] : memref<50xf32, #tpu.memory_space<smem>>
      %153 = vector.extract_strided_slice %136 {offsets = [0, 1], sizes = [16, 16], strides = [1, 1]} : vector<16x20xf32> to vector<16x16xf32>
      %154 = vector.broadcast %152 : f32 to vector<16x16xf32>
      %155 = arith.mulf %154, %153 : vector<16x16xf32>
      %156 = arith.addf %151, %155 : vector<16x16xf32>
      %c12 = arith.constant 12 : index
      %157 = memref.load %arg2[%c12] : memref<50xf32, #tpu.memory_space<smem>>
      %158 = vector.extract_strided_slice %134 {offsets = [0, 2], sizes = [16, 16], strides = [1, 1]} : vector<16x20xf32> to vector<16x16xf32>
      %159 = vector.broadcast %157 : f32 to vector<16x16xf32>
      %160 = arith.mulf %159, %158 : vector<16x16xf32>
      %161 = arith.addf %156, %160 : vector<16x16xf32>
      %c37 = arith.constant 37 : index
      %162 = memref.load %arg2[%c37] : memref<50xf32, #tpu.memory_space<smem>>
      %163 = vector.extract_strided_slice %136 {offsets = [0, 2], sizes = [16, 16], strides = [1, 1]} : vector<16x20xf32> to vector<16x16xf32>
      %164 = vector.broadcast %162 : f32 to vector<16x16xf32>
      %165 = arith.mulf %164, %163 : vector<16x16xf32>
      %166 = arith.addf %161, %165 : vector<16x16xf32>
      %c13 = arith.constant 13 : index
      %167 = memref.load %arg2[%c13] : memref<50xf32, #tpu.memory_space<smem>>
      %168 = vector.extract_strided_slice %134 {offsets = [0, 3], sizes = [16, 16], strides = [1, 1]} : vector<16x20xf32> to vector<16x16xf32>
      %169 = vector.broadcast %167 : f32 to vector<16x16xf32>
      %170 = arith.mulf %169, %168 : vector<16x16xf32>
      %171 = arith.addf %166, %170 : vector<16x16xf32>
      %c38 = arith.constant 38 : index
      %172 = memref.load %arg2[%c38] : memref<50xf32, #tpu.memory_space<smem>>
      %173 = vector.extract_strided_slice %136 {offsets = [0, 3], sizes = [16, 16], strides = [1, 1]} : vector<16x20xf32> to vector<16x16xf32>
      %174 = vector.broadcast %172 : f32 to vector<16x16xf32>
      %175 = arith.mulf %174, %173 : vector<16x16xf32>
      %176 = arith.addf %171, %175 : vector<16x16xf32>
      %c14 = arith.constant 14 : index
      %177 = memref.load %arg2[%c14] : memref<50xf32, #tpu.memory_space<smem>>
      %178 = vector.extract_strided_slice %134 {offsets = [0, 4], sizes = [16, 16], strides = [1, 1]} : vector<16x20xf32> to vector<16x16xf32>
      %179 = vector.broadcast %177 : f32 to vector<16x16xf32>
      %180 = arith.mulf %179, %178 : vector<16x16xf32>
      %181 = arith.addf %176, %180 : vector<16x16xf32>
      %c39 = arith.constant 39 : index
      %182 = memref.load %arg2[%c39] : memref<50xf32, #tpu.memory_space<smem>>
      %183 = vector.extract_strided_slice %136 {offsets = [0, 4], sizes = [16, 16], strides = [1, 1]} : vector<16x20xf32> to vector<16x16xf32>
      %184 = vector.broadcast %182 : f32 to vector<16x16xf32>
      %185 = arith.mulf %184, %183 : vector<16x16xf32>
      %186 = arith.addf %181, %185 : vector<16x16xf32>
      %c0_45 = arith.constant 0 : index
      %c3_46 = arith.constant 3 : index
      %c0_47 = arith.constant 0 : index
      %187 = vector.load %arg7[%c0_45, %c3_46, %c0_47] : memref<2x20x20xf32, #tpu.memory_space<vmem>>, vector<1x16x20xf32>
      %188 = vector.shape_cast %187 : vector<1x16x20xf32> to vector<16x20xf32>
      %c1_48 = arith.constant 1 : index
      %c3_49 = arith.constant 3 : index
      %c0_50 = arith.constant 0 : index
      %189 = vector.load %arg7[%c1_48, %c3_49, %c0_50] : memref<2x20x20xf32, #tpu.memory_space<vmem>>, vector<1x16x20xf32>
      %190 = vector.shape_cast %189 : vector<1x16x20xf32> to vector<16x20xf32>
      %c15 = arith.constant 15 : index
      %191 = memref.load %arg2[%c15] : memref<50xf32, #tpu.memory_space<smem>>
      %192 = vector.extract_strided_slice %188 {offsets = [0, 0], sizes = [16, 16], strides = [1, 1]} : vector<16x20xf32> to vector<16x16xf32>
      %193 = vector.broadcast %191 : f32 to vector<16x16xf32>
      %194 = arith.mulf %193, %192 : vector<16x16xf32>
      %195 = arith.addf %186, %194 : vector<16x16xf32>
      %c40 = arith.constant 40 : index
      %196 = memref.load %arg2[%c40] : memref<50xf32, #tpu.memory_space<smem>>
      %197 = vector.extract_strided_slice %190 {offsets = [0, 0], sizes = [16, 16], strides = [1, 1]} : vector<16x20xf32> to vector<16x16xf32>
      %198 = vector.broadcast %196 : f32 to vector<16x16xf32>
      %199 = arith.mulf %198, %197 : vector<16x16xf32>
      %200 = arith.addf %195, %199 : vector<16x16xf32>
      %c16 = arith.constant 16 : index
      %201 = memref.load %arg2[%c16] : memref<50xf32, #tpu.memory_space<smem>>
      %202 = vector.extract_strided_slice %188 {offsets = [0, 1], sizes = [16, 16], strides = [1, 1]} : vector<16x20xf32> to vector<16x16xf32>
      %203 = vector.broadcast %201 : f32 to vector<16x16xf32>
      %204 = arith.mulf %203, %202 : vector<16x16xf32>
      %205 = arith.addf %200, %204 : vector<16x16xf32>
      %c41 = arith.constant 41 : index
      %206 = memref.load %arg2[%c41] : memref<50xf32, #tpu.memory_space<smem>>
      %207 = vector.extract_strided_slice %190 {offsets = [0, 1], sizes = [16, 16], strides = [1, 1]} : vector<16x20xf32> to vector<16x16xf32>
      %208 = vector.broadcast %206 : f32 to vector<16x16xf32>
      %209 = arith.mulf %208, %207 : vector<16x16xf32>
      %210 = arith.addf %205, %209 : vector<16x16xf32>
      %c17 = arith.constant 17 : index
      %211 = memref.load %arg2[%c17] : memref<50xf32, #tpu.memory_space<smem>>
      %212 = vector.extract_strided_slice %188 {offsets = [0, 2], sizes = [16, 16], strides = [1, 1]} : vector<16x20xf32> to vector<16x16xf32>
      %213 = vector.broadcast %211 : f32 to vector<16x16xf32>
      %214 = arith.mulf %213, %212 : vector<16x16xf32>
      %215 = arith.addf %210, %214 : vector<16x16xf32>
      %c42 = arith.constant 42 : index
      %216 = memref.load %arg2[%c42] : memref<50xf32, #tpu.memory_space<smem>>
      %217 = vector.extract_strided_slice %190 {offsets = [0, 2], sizes = [16, 16], strides = [1, 1]} : vector<16x20xf32> to vector<16x16xf32>
      %218 = vector.broadcast %216 : f32 to vector<16x16xf32>
      %219 = arith.mulf %218, %217 : vector<16x16xf32>
      %220 = arith.addf %215, %219 : vector<16x16xf32>
      %c18 = arith.constant 18 : index
      %221 = memref.load %arg2[%c18] : memref<50xf32, #tpu.memory_space<smem>>
      %222 = vector.extract_strided_slice %188 {offsets = [0, 3], sizes = [16, 16], strides = [1, 1]} : vector<16x20xf32> to vector<16x16xf32>
      %223 = vector.broadcast %221 : f32 to vector<16x16xf32>
      %224 = arith.mulf %223, %222 : vector<16x16xf32>
      %225 = arith.addf %220, %224 : vector<16x16xf32>
      %c43 = arith.constant 43 : index
      %226 = memref.load %arg2[%c43] : memref<50xf32, #tpu.memory_space<smem>>
      %227 = vector.extract_strided_slice %190 {offsets = [0, 3], sizes = [16, 16], strides = [1, 1]} : vector<16x20xf32> to vector<16x16xf32>
      %228 = vector.broadcast %226 : f32 to vector<16x16xf32>
      %229 = arith.mulf %228, %227 : vector<16x16xf32>
      %230 = arith.addf %225, %229 : vector<16x16xf32>
      %c19 = arith.constant 19 : index
      %231 = memref.load %arg2[%c19] : memref<50xf32, #tpu.memory_space<smem>>
      %232 = vector.extract_strided_slice %188 {offsets = [0, 4], sizes = [16, 16], strides = [1, 1]} : vector<16x20xf32> to vector<16x16xf32>
      %233 = vector.broadcast %231 : f32 to vector<16x16xf32>
      %234 = arith.mulf %233, %232 : vector<16x16xf32>
      %235 = arith.addf %230, %234 : vector<16x16xf32>
      %c44 = arith.constant 44 : index
      %236 = memref.load %arg2[%c44] : memref<50xf32, #tpu.memory_space<smem>>
      %237 = vector.extract_strided_slice %190 {offsets = [0, 4], sizes = [16, 16], strides = [1, 1]} : vector<16x20xf32> to vector<16x16xf32>
      %238 = vector.broadcast %236 : f32 to vector<16x16xf32>
      %239 = arith.mulf %238, %237 : vector<16x16xf32>
      %240 = arith.addf %235, %239 : vector<16x16xf32>
      %c0_51 = arith.constant 0 : index
      %c4_52 = arith.constant 4 : index
      %c0_53 = arith.constant 0 : index
      %241 = vector.load %arg7[%c0_51, %c4_52, %c0_53] : memref<2x20x20xf32, #tpu.memory_space<vmem>>, vector<1x16x20xf32>
      %242 = vector.shape_cast %241 : vector<1x16x20xf32> to vector<16x20xf32>
      %c1_54 = arith.constant 1 : index
      %c4_55 = arith.constant 4 : index
      %c0_56 = arith.constant 0 : index
      %243 = vector.load %arg7[%c1_54, %c4_55, %c0_56] : memref<2x20x20xf32, #tpu.memory_space<vmem>>, vector<1x16x20xf32>
      %244 = vector.shape_cast %243 : vector<1x16x20xf32> to vector<16x20xf32>
      %c20 = arith.constant 20 : index
      %245 = memref.load %arg2[%c20] : memref<50xf32, #tpu.memory_space<smem>>
      %246 = vector.extract_strided_slice %242 {offsets = [0, 0], sizes = [16, 16], strides = [1, 1]} : vector<16x20xf32> to vector<16x16xf32>
      %247 = vector.broadcast %245 : f32 to vector<16x16xf32>
      %248 = arith.mulf %247, %246 : vector<16x16xf32>
      %249 = arith.addf %240, %248 : vector<16x16xf32>
      %c45 = arith.constant 45 : index
      %250 = memref.load %arg2[%c45] : memref<50xf32, #tpu.memory_space<smem>>
      %251 = vector.extract_strided_slice %244 {offsets = [0, 0], sizes = [16, 16], strides = [1, 1]} : vector<16x20xf32> to vector<16x16xf32>
      %252 = vector.broadcast %250 : f32 to vector<16x16xf32>
      %253 = arith.mulf %252, %251 : vector<16x16xf32>
      %254 = arith.addf %249, %253 : vector<16x16xf32>
      %c21 = arith.constant 21 : index
      %255 = memref.load %arg2[%c21] : memref<50xf32, #tpu.memory_space<smem>>
      %256 = vector.extract_strided_slice %242 {offsets = [0, 1], sizes = [16, 16], strides = [1, 1]} : vector<16x20xf32> to vector<16x16xf32>
      %257 = vector.broadcast %255 : f32 to vector<16x16xf32>
      %258 = arith.mulf %257, %256 : vector<16x16xf32>
      %259 = arith.addf %254, %258 : vector<16x16xf32>
      %c46 = arith.constant 46 : index
      %260 = memref.load %arg2[%c46] : memref<50xf32, #tpu.memory_space<smem>>
      %261 = vector.extract_strided_slice %244 {offsets = [0, 1], sizes = [16, 16], strides = [1, 1]} : vector<16x20xf32> to vector<16x16xf32>
      %262 = vector.broadcast %260 : f32 to vector<16x16xf32>
      %263 = arith.mulf %262, %261 : vector<16x16xf32>
      %264 = arith.addf %259, %263 : vector<16x16xf32>
      %c22 = arith.constant 22 : index
      %265 = memref.load %arg2[%c22] : memref<50xf32, #tpu.memory_space<smem>>
      %266 = vector.extract_strided_slice %242 {offsets = [0, 2], sizes = [16, 16], strides = [1, 1]} : vector<16x20xf32> to vector<16x16xf32>
      %267 = vector.broadcast %265 : f32 to vector<16x16xf32>
      %268 = arith.mulf %267, %266 : vector<16x16xf32>
      %269 = arith.addf %264, %268 : vector<16x16xf32>
      %c47 = arith.constant 47 : index
      %270 = memref.load %arg2[%c47] : memref<50xf32, #tpu.memory_space<smem>>
      %271 = vector.extract_strided_slice %244 {offsets = [0, 2], sizes = [16, 16], strides = [1, 1]} : vector<16x20xf32> to vector<16x16xf32>
      %272 = vector.broadcast %270 : f32 to vector<16x16xf32>
      %273 = arith.mulf %272, %271 : vector<16x16xf32>
      %274 = arith.addf %269, %273 : vector<16x16xf32>
      %c23 = arith.constant 23 : index
      %275 = memref.load %arg2[%c23] : memref<50xf32, #tpu.memory_space<smem>>
      %276 = vector.extract_strided_slice %242 {offsets = [0, 3], sizes = [16, 16], strides = [1, 1]} : vector<16x20xf32> to vector<16x16xf32>
      %277 = vector.broadcast %275 : f32 to vector<16x16xf32>
      %278 = arith.mulf %277, %276 : vector<16x16xf32>
      %279 = arith.addf %274, %278 : vector<16x16xf32>
      %c48 = arith.constant 48 : index
      %280 = memref.load %arg2[%c48] : memref<50xf32, #tpu.memory_space<smem>>
      %281 = vector.extract_strided_slice %244 {offsets = [0, 3], sizes = [16, 16], strides = [1, 1]} : vector<16x20xf32> to vector<16x16xf32>
      %282 = vector.broadcast %280 : f32 to vector<16x16xf32>
      %283 = arith.mulf %282, %281 : vector<16x16xf32>
      %284 = arith.addf %279, %283 : vector<16x16xf32>
      %c24 = arith.constant 24 : index
      %285 = memref.load %arg2[%c24] : memref<50xf32, #tpu.memory_space<smem>>
      %286 = vector.extract_strided_slice %242 {offsets = [0, 4], sizes = [16, 16], strides = [1, 1]} : vector<16x20xf32> to vector<16x16xf32>
      %287 = vector.broadcast %285 : f32 to vector<16x16xf32>
      %288 = arith.mulf %287, %286 : vector<16x16xf32>
      %289 = arith.addf %284, %288 : vector<16x16xf32>
      %c49 = arith.constant 49 : index
      %290 = memref.load %arg2[%c49] : memref<50xf32, #tpu.memory_space<smem>>
      %291 = vector.extract_strided_slice %244 {offsets = [0, 4], sizes = [16, 16], strides = [1, 1]} : vector<16x20xf32> to vector<16x16xf32>
      %292 = vector.broadcast %290 : f32 to vector<16x16xf32>
      %293 = arith.mulf %292, %291 : vector<16x16xf32>
      %294 = arith.addf %289, %293 : vector<16x16xf32>
      %295 = arith.negf %294 : vector<16x16xf32>
      %296 = math.exp %295 : vector<16x16xf32>
      %cst_57 = arith.constant 1.000000e+00 : f32
      %297 = vector.broadcast %cst_57 : f32 to vector<16x16xf32>
      %298 = arith.addf %297, %296 : vector<16x16xf32>
      %299 = arith.divf %297, %298 : vector<16x16xf32>
      %c0_58 = arith.constant 0 : index
      %c0_59 = arith.constant 0 : index
      %c0_60 = arith.constant 0 : index
      %300 = vector.load %arg4[%c0_58, %c0_59, %c0_60] : memref<1x16x16xf32, #tpu.memory_space<vmem>>, vector<1x16x16xf32>
      %301 = vector.shape_cast %300 : vector<1x16x16xf32> to vector<16x16xf32>
      %302 = vector.shape_cast %299 : vector<16x16xf32> to vector<1x16x16xf32>
      tpu.vector_store %arg4[%c0_58, %c0_59, %c0_60], %302 {strides = array<i32>} : memref<1x16x16xf32, #tpu.memory_space<vmem>>, vector<1x16x16xf32>,
    } else {
    }
    return
  }
  func.func @transform_0(%arg0: i32, %arg1: i32, %arg2: memref<50xf32, #tpu.memory_space<smem>>) -> (i32, i32, i32, i32) {
    %c0_i32 = arith.constant 0 : i32
    %c0_i32_0 = arith.constant 0 : i32
    %c0_i32_1 = arith.constant 0 : i32
    return %arg0, %arg1, %c0_i32, %c0_i32_0 : i32, i32, i32, i32
  }
  func.func @transform_1(%arg0: i32, %arg1: i32, %arg2: memref<50xf32, #tpu.memory_space<smem>>) -> (i32, i32, i32) {
    %c0_i32 = arith.constant 0 : i32
    %c0_i32_0 = arith.constant 0 : i32
    %c0_i32_1 = arith.constant 0 : i32
    return %arg0, %c0_i32, %c0_i32_0 : i32, i32, i32
  }
}

</mosaic_0001>

<llo_original>
// kernel: tpu_custom_call.1
$region0: #{tpu_custom_call.1}
  #allocation0 [shape = 'u32[]', space=smem, size = 0x4, offset = 0x4, fixed_abs, tag = 'smem constant byte address 0x4 - core index']
  #allocation1 [shape = 'u32[144,128]{1,0:T(1,128)}', space=vmem, size = 0x12000, scoped, tag = 'internal scratch']
  #allocation2 [shape = 'f32[16,16]{1,0:T(8,128)}', space=vmem, size = 0x2000, scoped, tag = 'scratch operand']
  #allocation3 [shape = 'f32[16,16]{1,0:T(8,128)}', space=vmem, size = 0x2000, scoped, tag = 'scratch operand']
  #allocation4 [shape = 'f32[2,20,20]{2,1,0:T(8,128)}', space=vmem, size = 0x6000, scoped, tag = 'scratch operand']
  #allocation5 [shape = 's32[1]{0}', space=sflag, size = 0x4, scoped, tag = 'scoped memory for tpu_custom_call.1']
  #allocation6 [shape = 'u8[512]{0}', space=smem, size = 0x200, scoped, tag = 'prefetched SMEM operand 0']
  %s0 = inlined_call_operand.hbm [shape: f32[50], index: 0, kind: input, shape index: {}]
  %s1 = inlined_call_operand.hbm [shape: f32[2,4,16,16], index: 1, kind: input, shape index: {}]
  %s2 = inlined_call_operand.hbm [shape: f32[2,16,16], index: 2, kind: output, shape index: {}]
  %s3 = sld [smem:[#allocation0]]
  $region49: #{tpu_custom_call.1} parent=0
    _
  %s5 = ssub.s32 1, %s3
  %s6 = scalar_select 0, %s5, %s3
  %8 = dma.hbm_to_smem %s0, 16, [#allocation6], [#allocation5]
  %9 = dma.done [#allocation5], 16
  %10 = sfence
  $region1: #{tpu_custom_call.1} parent=0
    #allocation7 [shape = 'u8[65536]{0}', space=vmem, size = 0x10000, scoped, tag = 'input window, operand 1']
    #allocation8 [shape = 's32[2]{0}', space=sflag, size = 0x8, scoped, tag = 'scoped memory for tpu_custom_call.1']
    #allocation9 [shape = 's32[2]{0}', space=sflag, size = 0x8, scoped, tag = 'scoped memory for tpu_custom_call.1']
    #allocation10 [shape = 'u8[16384]{0}', space=vmem, size = 0x4000, scoped, tag = 'output window, operand 0']
    %11 = vsyncpa [#allocation8], 0
    %s12 = scalar_lea.sflag [#allocation8], 1
    %13 = vsyncpa %s12, 0
    %14 = vsyncpa [#allocation9], 0
    %s15 = scalar_lea.sflag [#allocation9], 1
    %16 = vsyncpa %s15, 0
    loop: start=0, step=1, limit=4
    $region2: #{tpu_custom_call.1} parent=1 // loop_pre_header
      _
    $region3: #{tpu_custom_call.1} parent=1 // loop_header
      %s18 = sphi 0, %s22
      %p19 = scmp.ge.s32.totalorder %s18, 4
      %s25 = sphi 0, %s37
      %s26 = sphi 0, %s33
      %s27 = sphi 0, %s25
      %s28 = sphi 0, %s26
      %s29 = sphi 0, %s27
      %s30 = sphi 0, %s28
      %s42 = sphi 0, %s44
      %s45 = sphi 0, %s42
      %s46 = sphi 0, %s45
      %s62 = sphi 0, %s46
      %s68 = sphi 0, %s70
      %s71 = sphi 0, %s68
      %s72 = sphi 0, %s71
      %s88 = sphi 0, %s72
    $region4: #{tpu_custom_call.1} parent=1 // loop_header_branch
      %21 = sbr.rel (%p19) target = $region8
    $region5: #{tpu_custom_call.1} parent=1 // loop_body
      %s23 = ssub.s32 %s18, 1
      %s24 = ssub.s32 %s18, 2
      %s31 = sadd.s32 1, %s26
      %p32 = scmp.ge.s32.totalorder %s31, 1
      %s33 = scalar_select %p32, 0, %s31
      %s34 = sadd.s32 1, %s25
      %s35 = scalar_select %p32, %s34, %s25
      %p36 = scmp.ge.s32.totalorder %s35, 2
      %s37 = scalar_select %p36, 0, %s35
      %s38 = ssub.s32 %s25, %s37
      %s39 = ssub.s32 %s26, %s33
      %s40 = sor.u32 %s38, %s39
      %p41 = scmp.eq.s32.totalorder %s40, 0
      %s43 = sadd.s32 %s42, 1
      %s44 = scalar_select %p41, %s42, %s43
      %p47 = pneg %p41
      %p48 = scmp.eq.s32.totalorder %s18, 1
      %p49 = por %p47, %p48
      %p50 = scmp.ne.s32.totalorder %s42, %s45
      %p51 = scmp.eq.s32.totalorder %s18, 0
      %p52 = por %p50, %p51
      %p53 = scmp.ne.s32.totalorder %s42, %s45
      %p54 = scmp.eq.s32.totalorder %s23, 1
      %p55 = por %p53, %p54
      %p56 = scmp.ne.s32.totalorder %s45, %s46
      %p57 = scmp.eq.s32.totalorder %s23, 0
      %p58 = por %p56, %p57
      %p59 = scmp.ne.s32.totalorder %s45, %s46
      %p60 = scmp.eq.s32.totalorder %s24, 1
      %p61 = por %p59, %p60
      %p63 = scmp.ne.s32.totalorder %s46, %s62
      %p64 = scmp.eq.s32.totalorder %s24, 0
      %p65 = por %p63, %p64
      %s66 = ssub.s32 %s25, %s37
      %p67 = scmp.eq.s32.totalorder %s66, 0
      %s69 = sadd.s32 %s68, 1
      %s70 = scalar_select %p67, %s68, %s69
      %p73 = pneg %p67
      %p74 = scmp.eq.s32.totalorder %s18, 1
      %p75 = por %p73, %p74
      %p76 = scmp.ne.s32.totalorder %s68, %s71
      %p77 = scmp.eq.s32.totalorder %s18, 0
      %p78 = por %p76, %p77
      %p79 = scmp.ne.s32.totalorder %s68, %s71
      %p80 = scmp.eq.s32.totalorder %s23, 1
      %p81 = por %p79, %p80
      %p82 = scmp.ne.s32.totalorder %s71, %s72
      %p83 = scmp.eq.s32.totalorder %s23, 0
      %p84 = por %p82, %p83
      %p85 = scmp.ne.s32.totalorder %s71, %s72
      %p86 = scmp.eq.s32.totalorder %s24, 1
      %p87 = por %p85, %p86
      %p89 = scmp.ne.s32.totalorder %s72, %s88
      %p90 = scmp.eq.s32.totalorder %s24, 0
      %p91 = por %p89, %p90
      %p92 = scmp.le.s32.totalorder 1, %s18
      %p93 = scmp.lt.s32.totalorder %s18, 3
      %p94 = pnand %p92, %p93
      %p95 = pneg %p94
      // Predicated region
      $region9: #{tpu_custom_call.1} parent=5 // pred_check
        _
      $region10: #{tpu_custom_call.1} parent=5 // pred_check_branch
        %97 = sbr.rel (%p94) target = $region12
      $region11: #{tpu_custom_call.1} parent=5 // pred_region
        %s98 = ssub.s32 %s18, 1
      $region12: #{tpu_custom_call.1} parent=5 // pred_fallthru
        _
      %p99 = scmp.lt.s32.totalorder %s18, 2
      // Predicated region
      $region13: #{tpu_custom_call.1} parent=5 // pred_check
        %p100 = pneg %p99
      $region14: #{tpu_custom_call.1} parent=5 // pred_check_branch
        %102 = sbr.rel (%p100) target = $region16
      $region15: #{tpu_custom_call.1} parent=5 // pred_region
        // Predicated region
        $region17: #{tpu_custom_call.1} parent=15 // pred_check
          %p103 = pneg %p52
        $region18: #{tpu_custom_call.1} parent=15 // pred_check_branch
          %105 = sbr.rel (%p103) target = $region20
        $region19: #{tpu_custom_call.1} parent=15 // pred_region
          %s106 = sand.u32 %s42, 1
          %s107 = scalar_lea.sflag [#allocation8], %s106
          %s108 = sand.u32 %s42, 1
          %s109 = smul.addr %s108, 64
          %s110 = scalar_lea.vmem [#allocation7], %s109
          %s111 = smul.u32 4, %s26
          %s113 = ssub.s32 1024, 1024
          %114 = vsyncadd %s107, %s113
          %s115 = smul.addr %s111, 2
          %s116 = smul.addr %s25, 8
          %s117 = sadd.s32 %s115, %s116
          %s118 = smul.addr %s117, 128
          %s119 = scalar_lea.hbm %s1, %s118
          %s120 = sshll.u32 %s110, 4
          %s121 = int_to_ptr.vmem [resolvable:$true] %s120
          %126 = dma.hbm_to_vmem [thread:$0]  %s119, 1024, %s121, %s107, 128, 128, 8
        $region20: #{tpu_custom_call.1} parent=15 // pred_fallthru
          _
      $region16: #{tpu_custom_call.1} parent=5 // pred_fallthru
        _
      %p127 = scmp.le.s32.totalorder 1, %s18
      %p128 = scmp.lt.s32.totalorder %s18, 3
      %p129 = pnand %p127, %p128
      %p130 = pneg %p129
      // Predicated region
      $region21: #{tpu_custom_call.1} parent=5 // pred_check
        _
      $region22: #{tpu_custom_call.1} parent=5 // pred_check_branch
        %132 = sbr.rel (%p129) target = $region24
      $region23: #{tpu_custom_call.1} parent=5 // pred_region
        %s133 = ssub.s32 %s18, 1
        %s134 = sand.u32 %s45, 1
        %s135 = scalar_lea.sflag [#allocation8], %s134
        %s136 = sand.u32 %s45, 1
        %s137 = smul.addr %s136, 64
        %s138 = scalar_lea.vmem [#allocation7], %s137
        // Predicated region
        $region25: #{tpu_custom_call.1} parent=23 // pred_check
          %p139 = pneg %p58
        $region26: #{tpu_custom_call.1} parent=23 // pred_check_branch
          %141 = sbr.rel (%p139) target = $region28
        $region27: #{tpu_custom_call.1} parent=23 // pred_region
          %142 = dma.done %s135, 1024
        $region28: #{tpu_custom_call.1} parent=23 // pred_fallthru
          _
        %s143 = sand.u32 %s45, 1
        %s144 = scalar_lea.sflag [#allocation8], %s143
        %s145 = sand.u32 %s45, 1
        %s146 = smul.addr %s145, 64
        %s147 = scalar_lea.vmem [#allocation7], %s146
        %p148 = pneg %p58
        %p149 = pneg %p55
        %p150 = pneg %p84
        %p151 = pneg %p81
        %s152 = sand.u32 %s71, 1
        %s153 = scalar_lea.sflag [#allocation9], %s152
        %s154 = sand.u32 %s71, 1
        %s155 = smul.addr %s154, 16
        %s156 = scalar_lea.vmem [#allocation10], %s155
        %s157 = smul.u32 4, %s28
        %v158 = vld [vmem:[%s138] sm:$0xff]
        %v159 = vld [vmem:[%s138 + $0x8] sm:$0xff]
        %v160 = vld [vmem:[%s138 + $0x10] sm:$0xff]
        %v161 = vld [vmem:[%s138 + $0x18] sm:$0xff]
        %v162 = vld [vmem:[%s138 + $0x20] sm:$0xff]
        %v163 = vld [vmem:[%s138 + $0x28] sm:$0xff]
        %v164 = vld [vmem:[%s138 + $0x30] sm:$0xff]
        %v165 = vld [vmem:[%s138 + $0x38] sm:$0xff]
        %vm166 = vcmask 130048
        %v167 = vsel %vm166, %v158, -inf
        %v168 = vsel %vm166, %v160, -inf
        %v169 = vsel %vm166, %v162, -inf
        %v170 = vmax.f32 %v167, %v169
        %v171 = vsel %vm166, %v164, -inf
        %v172 = vmax.f32 %v168, %v171
        %v173 = vmax.f32 %v170, %v172
        %v174 = vsel %vm166, %v159, -inf
        %v175 = vsel %vm166, %v161, -inf
        %v176 = vsel %vm166, %v163, -inf
        %v177 = vmax.f32 %v174, %v176
        %v178 = vsel %vm166, %v165, -inf
        %v179 = vmax.f32 %v175, %v178
        %v180 = vmax.f32 %v177, %v179
        %v181 = vsel %vm166, %v158, 0.0
        %v182 = vsel %vm166, %v160, 0.0
        %v183 = vadd.f32 %v181, %v182
        %v184 = vsel %vm166, %v162, 0.0
        %v185 = vadd.f32 %v183, %v184
        %v186 = vsel %vm166, %v164, 0.0
        %v187 = vadd.f32 %v185, %v186
        %v188 = vsel %vm166, %v159, 0.0
        %v189 = vsel %vm166, %v161, 0.0
        %v190 = vadd.f32 %v188, %v189
        %v191 = vsel %vm166, %v163, 0.0
        %v192 = vadd.f32 %v190, %v191
        %v193 = vsel %vm166, %v165, 0.0
        %v194 = vadd.f32 %v192, %v193
        %p195 = scmp.eq.s32.totalorder %s28, 0
        // Predicated region
        $region29: #{tpu_custom_call.1} parent=23 // pred_check
          %p196 = pneg %p195
        $region30: #{tpu_custom_call.1} parent=23 // pred_check_branch
          %198 = sbr.rel (%p196) target = $region32
        $region31: #{tpu_custom_call.1} parent=23 // pred_region
          %vm199 = vcmask 162816
          %200 = vst.msk [vmem:[#allocation4] sm:$0xff] %vm199, 0.0
          %201 = vst.msk [vmem:[#allocation4 + $0x8] sm:$0xff] %vm199, 0.0
          %vm202 = vcmask 158720
          %203 = vst.msk [vmem:[#allocation4 + $0x10] sm:$0xf] %vm202, 0.0
          %204 = vst.msk [vmem:[#allocation4 + $0x18] sm:$0xff] %vm199, 0.0
          %205 = vst.msk [vmem:[#allocation4 + $0x20] sm:$0xff] %vm199, 0.0
          %206 = vst.msk [vmem:[#allocation4 + $0x28] sm:$0xf] %vm202, 0.0
          %207 = vst.msk [vmem:[#allocation2] sm:$0xff] %vm166, -inf
          %208 = vst.msk [vmem:[#allocation2 + $0x8] sm:$0xff] %vm166, -inf
          %209 = vst.msk [vmem:[#allocation3] sm:$0xff] %vm166, 0.0
          %210 = vst.msk [vmem:[#allocation3 + $0x8] sm:$0xff] %vm166, 0.0
        $region32: #{tpu_custom_call.1} parent=23 // pred_fallthru
          _
        %v211 = vld [vmem:[#allocation2] sm:$0xff]
        %v212 = vld [vmem:[#allocation2 + $0x8] sm:$0xff]
        %v213 = vmax.f32 %v211, %v173
        %v214 = vmax.f32 %v212, %v180
        %215 = vst.msk [vmem:[#allocation2] sm:$0xff] %vm166, %v213
        %216 = vst.msk [vmem:[#allocation2 + $0x8] sm:$0xff] %vm166, %v214
        %v217 = vld [vmem:[#allocation3] sm:$0xff]
        %v218 = vld [vmem:[#allocation3 + $0x8] sm:$0xff]
        %v219 = vadd.f32 %v217, %v187
        %v220 = vadd.f32 %v218, %v194
        %221 = vst.msk [vmem:[#allocation3] sm:$0xff] %vm166, %v219
        %222 = vst.msk [vmem:[#allocation3 + $0x8] sm:$0xff] %vm166, %v220
        // Predicated region
        $region33: #{tpu_custom_call.1} parent=23 // pred_check
          %p223 = pneg %p195
        $region34: #{tpu_custom_call.1} parent=23 // pred_check_branch
          %225 = sbr.rel (%p223) target = $region36
        $region35: #{tpu_custom_call.1} parent=23 // pred_region
          %v226 = vld [vmem:[#allocation2] sm:$0xff]
          %v227 = vld [vmem:[#allocation2 + $0x8] sm:$0xff]
          %230 = vrot.lane.b32.xlu0 %v226, 2
          %v231 = vpop.permute.xlu0 %230
          %232 = vrot.lane.b32.xlu0 %v227, 2
          %v233 = vpop.permute.xlu0 %232
          %vm236 = vcmask 146448
          %237 = vst.msk [vmem:[#allocation4 + $0x2] sm:$0xff] %vm236, %v231
          %238 = vst.msk [vmem:[#allocation4 + $0xa] sm:$0xff] %vm236, %v233
          %v239 = vld [vmem:[#allocation3] sm:$0xff]
          %v240 = vld [vmem:[#allocation3 + $0x8] sm:$0xff]
          %243 = vrot.lane.b32.xlu0 %v239, 2
          %v244 = vpop.permute.xlu0 %243
          %245 = vrot.lane.b32.xlu0 %v240, 2
          %v246 = vpop.permute.xlu0 %245
          %s249 = scalar_lea.vmem [#allocation4], 24
          %250 = vst.msk [vmem:[%s249 + $0x2] sm:$0xff] %vm236, %v244
          %251 = vst.msk [vmem:[%s249 + $0xa] sm:$0xff] %vm236, %v246
          %v252 = vld [vmem:[#allocation4] sm:$0xff]
          %v253 = vld [vmem:[#allocation4 + $0x8] sm:$0xff]
          %v254 = vld [vmem:[%s249] sm:$0xff]
          %v255 = vld [vmem:[%s249 + $0x8] sm:$0xff]
          %s256 = sld [smem:[#allocation6]]
          %v257 = vstv %s256
          %v258 = vmul.f32 %v257, %v252
          %v259 = vmul.f32 %v257, %v253
          %v260 = vadd.f32 %v258, 0.0
          %v261 = vadd.f32 %v259, 0.0
          %s262 = sld [smem:[#allocation6 + $0x19]]
          %v263 = vstv %s262
          %v264 = vmul.f32 %v263, %v254
          %v265 = vmul.f32 %v263, %v255
          %v266 = vadd.f32 %v260, %v264
          %v267 = vadd.f32 %v261, %v265
          %s268 = sld [smem:[#allocation6 + $0x1]]
          %v269 = vstv %s268
          %v270 = vmul.f32 %v269, %v252
          %v271 = vmul.f32 %v269, %v253
          %274 = vrot.lane.b32.xlu0 %v270, 127
          %v275 = vpop.permute.xlu0 %274
          %276 = vrot.lane.b32.xlu0 %v271, 127
          %v277 = vpop.permute.xlu0 %276
          %v280 = vadd.f32 %v266, %v275
          %v281 = vadd.f32 %v267, %v277
          %s282 = sld [smem:[#allocation6 + $0x1a]]
          %v283 = vstv %s282
          %v284 = vmul.f32 %v283, %v254
          %v285 = vmul.f32 %v283, %v255
          %288 = vrot.lane.b32.xlu0 %v284, 127
          %v289 = vpop.permute.xlu0 %288
          %290 = vrot.lane.b32.xlu0 %v285, 127
          %v291 = vpop.permute.xlu0 %290
          %v294 = vadd.f32 %v280, %v289
          %v295 = vadd.f32 %v281, %v291
          %s296 = sld [smem:[#allocation6 + $0x2]]
          %v297 = vstv %s296
          %v298 = vmul.f32 %v297, %v252
          %v299 = vmul.f32 %v297, %v253
          %302 = vrot.lane.b32.xlu0 %v298, 126
          %v303 = vpop.permute.xlu0 %302
          %304 = vrot.lane.b32.xlu0 %v299, 126
          %v305 = vpop.permute.xlu0 %304
          %v308 = vadd.f32 %v294, %v303
          %v309 = vadd.f32 %v295, %v305
          %s310 = sld [smem:[#allocation6 + $0x1b]]
          %v311 = vstv %s310
          %v312 = vmul.f32 %v311, %v254
          %v313 = vmul.f32 %v311, %v255
          %316 = vrot.lane.b32.xlu0 %v312, 126
          %v317 = vpop.permute.xlu0 %316
          %318 = vrot.lane.b32.xlu0 %v313, 126
          %v319 = vpop.permute.xlu0 %318
          %v322 = vadd.f32 %v308, %v317
          %v323 = vadd.f32 %v309, %v319
          %s324 = sld [smem:[#allocation6 + $0x3]]
          %v325 = vstv %s324
          %v326 = vmul.f32 %v325, %v252
          %v327 = vmul.f32 %v325, %v253
          %330 = vrot.lane.b32.xlu0 %v326, 125
          %v331 = vpop.permute.xlu0 %330
          %332 = vrot.lane.b32.xlu0 %v327, 125
          %v333 = vpop.permute.xlu0 %332
          %v336 = vadd.f32 %v322, %v331
          %v337 = vadd.f32 %v323, %v333
          %s338 = sld [smem:[#allocation6 + $0x1c]]
          %v339 = vstv %s338
          %v340 = vmul.f32 %v339, %v254
          %v341 = vmul.f32 %v339, %v255
          %344 = vrot.lane.b32.xlu0 %v340, 125
          %v345 = vpop.permute.xlu0 %344
          %346 = vrot.lane.b32.xlu0 %v341, 125
          %v347 = vpop.permute.xlu0 %346
          %v350 = vadd.f32 %v336, %v345
          %v351 = vadd.f32 %v337, %v347
          %s352 = sld [smem:[#allocation6 + $0x4]]
          %v353 = vstv %s352
          %v354 = vmul.f32 %v353, %v252
          %v355 = vmul.f32 %v353, %v253
          %358 = vrot.lane.b32.xlu0 %v354, 124
          %v359 = vpop.permute.xlu0 %358
          %360 = vrot.lane.b32.xlu0 %v355, 124
          %v361 = vpop.permute.xlu0 %360
          %v364 = vadd.f32 %v350, %v359
          %v365 = vadd.f32 %v351, %v361
          %s366 = sld [smem:[#allocation6 + $0x1d]]
          %v367 = vstv %s366
          %v368 = vmul.f32 %v367, %v254
          %v369 = vmul.f32 %v367, %v255
          %372 = vrot.lane.b32.xlu0 %v368, 124
          %v373 = vpop.permute.xlu0 %372
          %374 = vrot.lane.b32.xlu0 %v369, 124
          %v375 = vpop.permute.xlu0 %374
          %v378 = vadd.f32 %v364, %v373
          %v379 = vadd.f32 %v365, %v375
          %v380 = vld [vmem:[#allocation4 + $0x1] sm:$0xff]
          %v381 = vld [vmem:[#allocation4 + $0x9] sm:$0xff]
          %v382 = vld [vmem:[%s249 + $0x1] sm:$0xff]
          %v383 = vld [vmem:[%s249 + $0x9] sm:$0xff]
          %s384 = sld [smem:[#allocation6 + $0x5]]
          %v385 = vstv %s384
          %v386 = vmul.f32 %v385, %v380
          %v387 = vmul.f32 %v385, %v381
          %v388 = vadd.f32 %v378, %v386
          %v389 = vadd.f32 %v379, %v387
          %s390 = sld [smem:[#allocation6 + $0x1e]]
          %v391 = vstv %s390
          %v392 = vmul.f32 %v391, %v382
          %v393 = vmul.f32 %v391, %v383
          %v394 = vadd.f32 %v388, %v392
          %v395 = vadd.f32 %v389, %v393
          %s396 = sld [smem:[#allocation6 + $0x6]]
          %v397 = vstv %s396
          %v398 = vmul.f32 %v397, %v380
          %v399 = vmul.f32 %v397, %v381
          %402 = vrot.lane.b32.xlu0 %v398, 127
          %v403 = vpop.permute.xlu0 %402
          %404 = vrot.lane.b32.xlu0 %v399, 127
          %v405 = vpop.permute.xlu0 %404
          %v408 = vadd.f32 %v394, %v403
          %v409 = vadd.f32 %v395, %v405
          %s410 = sld [smem:[#allocation6 + $0x1f]]
          %v411 = vstv %s410
          %v412 = vmul.f32 %v411, %v382
          %v413 = vmul.f32 %v411, %v383
          %416 = vrot.lane.b32.xlu0 %v412, 127
          %v417 = vpop.permute.xlu0 %416
          %418 = vrot.lane.b32.xlu0 %v413, 127
          %v419 = vpop.permute.xlu0 %418
          %v422 = vadd.f32 %v408, %v417
          %v423 = vadd.f32 %v409, %v419
          %s424 = sld [smem:[#allocation6 + $0x7]]
          %v425 = vstv %s424
          %v426 = vmul.f32 %v425, %v380
          %v427 = vmul.f32 %v425, %v381
          %430 = vrot.lane.b32.xlu0 %v426, 126
          %v431 = vpop.permute.xlu0 %430
          %432 = vrot.lane.b32.xlu0 %v427, 126
          %v433 = vpop.permute.xlu0 %432
          %v436 = vadd.f32 %v422, %v431
          %v437 = vadd.f32 %v423, %v433
          %s438 = sld [smem:[#allocation6 + $0x20]]
          %v439 = vstv %s438
          %v440 = vmul.f32 %v439, %v382
          %v441 = vmul.f32 %v439, %v383
          %444 = vrot.lane.b32.xlu0 %v440, 126
          %v445 = vpop.permute.xlu0 %444
          %446 = vrot.lane.b32.xlu0 %v441, 126
          %v447 = vpop.permute.xlu0 %446
          %v450 = vadd.f32 %v436, %v445
          %v451 = vadd.f32 %v437, %v447
          %s452 = sld [smem:[#allocation6 + $0x8]]
          %v453 = vstv %s452
          %v454 = vmul.f32 %v453, %v380
          %v455 = vmul.f32 %v453, %v381
          %458 = vrot.lane.b32.xlu0 %v454, 125
          %v459 = vpop.permute.xlu0 %458
          %460 = vrot.lane.b32.xlu0 %v455, 125
          %v461 = vpop.permute.xlu0 %460
          %v464 = vadd.f32 %v450, %v459
          %v465 = vadd.f32 %v451, %v461
          %s466 = sld [smem:[#allocation6 + $0x21]]
          %v467 = vstv %s466
          %v468 = vmul.f32 %v467, %v382
          %v469 = vmul.f32 %v467, %v383
          %472 = vrot.lane.b32.xlu0 %v468, 125
          %v473 = vpop.permute.xlu0 %472
          %474 = vrot.lane.b32.xlu0 %v469, 125
          %v475 = vpop.permute.xlu0 %474
          %v478 = vadd.f32 %v464, %v473
          %v479 = vadd.f32 %v465, %v475
          %s480 = sld [smem:[#allocation6 + $0x9]]
          %v481 = vstv %s480
          %v482 = vmul.f32 %v481, %v380
          %v483 = vmul.f32 %v481, %v381
          %486 = vrot.lane.b32.xlu0 %v482, 124
          %v487 = vpop.permute.xlu0 %486
          %488 = vrot.lane.b32.xlu0 %v483, 124
          %v489 = vpop.permute.xlu0 %488
          %v492 = vadd.f32 %v478, %v487
          %v493 = vadd.f32 %v479, %v489
          %s494 = sld [smem:[#allocation6 + $0x22]]
          %v495 = vstv %s494
          %v496 = vmul.f32 %v495, %v382
          %v497 = vmul.f32 %v495, %v383
          %500 = vrot.lane.b32.xlu0 %v496, 124
          %v501 = vpop.permute.xlu0 %500
          %502 = vrot.lane.b32.xlu0 %v497, 124
          %v503 = vpop.permute.xlu0 %502
          %v506 = vadd.f32 %v492, %v501
          %v507 = vadd.f32 %v493, %v503
          %v508 = vld [vmem:[#allocation4 + $0x2] sm:$0xff]
          %v509 = vld [vmem:[#allocation4 + $0xa] sm:$0xff]
          %v510 = vld [vmem:[%s249 + $0x2] sm:$0xff]
          %v511 = vld [vmem:[%s249 + $0xa] sm:$0xff]
          %s512 = sld [smem:[#allocation6 + $0xa]]
          %v513 = vstv %s512
          %v514 = vmul.f32 %v513, %v508
          %v515 = vmul.f32 %v513, %v509
          %v516 = vadd.f32 %v506, %v514
          %v517 = vadd.f32 %v507, %v515
          %s518 = sld [smem:[#allocation6 + $0x23]]
          %v519 = vstv %s518
          %v520 = vmul.f32 %v519, %v510
          %v521 = vmul.f32 %v519, %v511
          %v522 = vadd.f32 %v516, %v520
          %v523 = vadd.f32 %v517, %v521
          %s524 = sld [smem:[#allocation6 + $0xb]]
          %v525 = vstv %s524
          %v526 = vmul.f32 %v525, %v508
          %v527 = vmul.f32 %v525, %v509
          %530 = vrot.lane.b32.xlu0 %v526, 127
          %v531 = vpop.permute.xlu0 %530
          %532 = vrot.lane.b32.xlu0 %v527, 127
          %v533 = vpop.permute.xlu0 %532
          %v536 = vadd.f32 %v522, %v531
          %v537 = vadd.f32 %v523, %v533
          %s538 = sld [smem:[#allocation6 + $0x24]]
          %v539 = vstv %s538
          %v540 = vmul.f32 %v539, %v510
          %v541 = vmul.f32 %v539, %v511
          %544 = vrot.lane.b32.xlu0 %v540, 127
          %v545 = vpop.permute.xlu0 %544
          %546 = vrot.lane.b32.xlu0 %v541, 127
          %v547 = vpop.permute.xlu0 %546
          %v550 = vadd.f32 %v536, %v545
          %v551 = vadd.f32 %v537, %v547
          %s552 = sld [smem:[#allocation6 + $0xc]]
          %v553 = vstv %s552
          %v554 = vmul.f32 %v553, %v508
          %v555 = vmul.f32 %v553, %v509
          %558 = vrot.lane.b32.xlu0 %v554, 126
          %v559 = vpop.permute.xlu0 %558
          %560 = vrot.lane.b32.xlu0 %v555, 126
          %v561 = vpop.permute.xlu0 %560
          %v564 = vadd.f32 %v550, %v559
          %v565 = vadd.f32 %v551, %v561
          %s566 = sld [smem:[#allocation6 + $0x25]]
          %v567 = vstv %s566
          %v568 = vmul.f32 %v567, %v510
          %v569 = vmul.f32 %v567, %v511
          %572 = vrot.lane.b32.xlu0 %v568, 126
          %v573 = vpop.permute.xlu0 %572
          %574 = vrot.lane.b32.xlu0 %v569, 126
          %v575 = vpop.permute.xlu0 %574
          %v578 = vadd.f32 %v564, %v573
          %v579 = vadd.f32 %v565, %v575
          %s580 = sld [smem:[#allocation6 + $0xd]]
          %v581 = vstv %s580
          %v582 = vmul.f32 %v581, %v508
          %v583 = vmul.f32 %v581, %v509
          %586 = vrot.lane.b32.xlu0 %v582, 125
          %v587 = vpop.permute.xlu0 %586
          %588 = vrot.lane.b32.xlu0 %v583, 125
          %v589 = vpop.permute.xlu0 %588
          %v592 = vadd.f32 %v578, %v587
          %v593 = vadd.f32 %v579, %v589
          %s594 = sld [smem:[#allocation6 + $0x26]]
          %v595 = vstv %s594
          %v596 = vmul.f32 %v595, %v510
          %v597 = vmul.f32 %v595, %v511
          %600 = vrot.lane.b32.xlu0 %v596, 125
          %v601 = vpop.permute.xlu0 %600
          %602 = vrot.lane.b32.xlu0 %v597, 125
          %v603 = vpop.permute.xlu0 %602
          %v606 = vadd.f32 %v592, %v601
          %v607 = vadd.f32 %v593, %v603
          %s608 = sld [smem:[#allocation6 + $0xe]]
          %v609 = vstv %s608
          %v610 = vmul.f32 %v609, %v508
          %v611 = vmul.f32 %v609, %v509
          %614 = vrot.lane.b32.xlu0 %v610, 124
          %v615 = vpop.permute.xlu0 %614
          %616 = vrot.lane.b32.xlu0 %v611, 124
          %v617 = vpop.permute.xlu0 %616
          %v620 = vadd.f32 %v606, %v615
          %v621 = vadd.f32 %v607, %v617
          %s622 = sld [smem:[#allocation6 + $0x27]]
          %v623 = vstv %s622
          %v624 = vmul.f32 %v623, %v510
          %v625 = vmul.f32 %v623, %v511
          %628 = vrot.lane.b32.xlu0 %v624, 124
          %v629 = vpop.permute.xlu0 %628
          %630 = vrot.lane.b32.xlu0 %v625, 124
          %v631 = vpop.permute.xlu0 %630
          %v634 = vadd.f32 %v620, %v629
          %v635 = vadd.f32 %v621, %v631
          %v636 = vld [vmem:[#allocation4 + $0x3] sm:$0xff]
          %v637 = vld [vmem:[#allocation4 + $0xb] sm:$0xff]
          %v638 = vld [vmem:[%s249 + $0x3] sm:$0xff]
          %v639 = vld [vmem:[%s249 + $0xb] sm:$0xff]
          %s640 = sld [smem:[#allocation6 + $0xf]]
          %v641 = vstv %s640
          %v642 = vmul.f32 %v641, %v636
          %v643 = vmul.f32 %v641, %v637
          %v644 = vadd.f32 %v634, %v642
          %v645 = vadd.f32 %v635, %v643
          %s646 = sld [smem:[#allocation6 + $0x28]]
          %v647 = vstv %s646
          %v648 = vmul.f32 %v647, %v638
          %v649 = vmul.f32 %v647, %v639
          %v650 = vadd.f32 %v644, %v648
          %v651 = vadd.f32 %v645, %v649
          %s652 = sld [smem:[#allocation6 + $0x10]]
          %v653 = vstv %s652
          %v654 = vmul.f32 %v653, %v636
          %v655 = vmul.f32 %v653, %v637
          %658 = vrot.lane.b32.xlu0 %v654, 127
          %v659 = vpop.permute.xlu0 %658
          %660 = vrot.lane.b32.xlu0 %v655, 127
          %v661 = vpop.permute.xlu0 %660
          %v664 = vadd.f32 %v650, %v659
          %v665 = vadd.f32 %v651, %v661
          %s666 = sld [smem:[#allocation6 + $0x29]]
          %v667 = vstv %s666
          %v668 = vmul.f32 %v667, %v638
          %v669 = vmul.f32 %v667, %v639
          %672 = vrot.lane.b32.xlu0 %v668, 127
          %v673 = vpop.permute.xlu0 %672
          %674 = vrot.lane.b32.xlu0 %v669, 127
          %v675 = vpop.permute.xlu0 %674
          %v678 = vadd.f32 %v664, %v673
          %v679 = vadd.f32 %v665, %v675
          %s680 = sld [smem:[#allocation6 + $0x11]]
          %v681 = vstv %s680
          %v682 = vmul.f32 %v681, %v636
          %v683 = vmul.f32 %v681, %v637
          %686 = vrot.lane.b32.xlu0 %v682, 126
          %v687 = vpop.permute.xlu0 %686
          %688 = vrot.lane.b32.xlu0 %v683, 126
          %v689 = vpop.permute.xlu0 %688
          %v692 = vadd.f32 %v678, %v687
          %v693 = vadd.f32 %v679, %v689
          %s694 = sld [smem:[#allocation6 + $0x2a]]
          %v695 = vstv %s694
          %v696 = vmul.f32 %v695, %v638
          %v697 = vmul.f32 %v695, %v639
          %700 = vrot.lane.b32.xlu0 %v696, 126
          %v701 = vpop.permute.xlu0 %700
          %702 = vrot.lane.b32.xlu0 %v697, 126
          %v703 = vpop.permute.xlu0 %702
          %v706 = vadd.f32 %v692, %v701
          %v707 = vadd.f32 %v693, %v703
          %s708 = sld [smem:[#allocation6 + $0x12]]
          %v709 = vstv %s708
          %v710 = vmul.f32 %v709, %v636
          %v711 = vmul.f32 %v709, %v637
          %714 = vrot.lane.b32.xlu0 %v710, 125
          %v715 = vpop.permute.xlu0 %714
          %716 = vrot.lane.b32.xlu0 %v711, 125
          %v717 = vpop.permute.xlu0 %716
          %v720 = vadd.f32 %v706, %v715
          %v721 = vadd.f32 %v707, %v717
          %s722 = sld [smem:[#allocation6 + $0x2b]]
          %v723 = vstv %s722
          %v724 = vmul.f32 %v723, %v638
          %v725 = vmul.f32 %v723, %v639
          %728 = vrot.lane.b32.xlu0 %v724, 125
          %v729 = vpop.permute.xlu0 %728
          %730 = vrot.lane.b32.xlu0 %v725, 125
          %v731 = vpop.permute.xlu0 %730
          %v734 = vadd.f32 %v720, %v729
          %v735 = vadd.f32 %v721, %v731
          %s736 = sld [smem:[#allocation6 + $0x13]]
          %v737 = vstv %s736
          %v738 = vmul.f32 %v737, %v636
          %v739 = vmul.f32 %v737, %v637
          %742 = vrot.lane.b32.xlu0 %v738, 124
          %v743 = vpop.permute.xlu0 %742
          %744 = vrot.lane.b32.xlu0 %v739, 124
          %v745 = vpop.permute.xlu0 %744
          %v748 = vadd.f32 %v734, %v743
          %v749 = vadd.f32 %v735, %v745
          %s750 = sld [smem:[#allocation6 + $0x2c]]
          %v751 = vstv %s750
          %v752 = vmul.f32 %v751, %v638
          %v753 = vmul.f32 %v751, %v639
          %756 = vrot.lane.b32.xlu0 %v752, 124
          %v757 = vpop.permute.xlu0 %756
          %758 = vrot.lane.b32.xlu0 %v753, 124
          %v759 = vpop.permute.xlu0 %758
          %v762 = vadd.f32 %v748, %v757
          %v763 = vadd.f32 %v749, %v759
          %v764 = vld [vmem:[#allocation4 + $0x4] sm:$0xff]
          %v765 = vld [vmem:[#allocation4 + $0xc] sm:$0xff]
          %v766 = vld [vmem:[%s249 + $0x4] sm:$0xff]
          %v767 = vld [vmem:[%s249 + $0xc] sm:$0xff]
          %s768 = sld [smem:[#allocation6 + $0x14]]
          %v769 = vstv %s768
          %v770 = vmul.f32 %v769, %v764
          %v771 = vmul.f32 %v769, %v765
          %v772 = vadd.f32 %v762, %v770
          %v773 = vadd.f32 %v763, %v771
          %s774 = sld [smem:[#allocation6 + $0x2d]]
          %v775 = vstv %s774
          %v776 = vmul.f32 %v775, %v766
          %v777 = vmul.f32 %v775, %v767
          %v778 = vadd.f32 %v772, %v776
          %v779 = vadd.f32 %v773, %v777
          %s780 = sld [smem:[#allocation6 + $0x15]]
          %v781 = vstv %s780
          %v782 = vmul.f32 %v781, %v764
          %v783 = vmul.f32 %v781, %v765
          %786 = vrot.lane.b32.xlu0 %v782, 127
          %v787 = vpop.permute.xlu0 %786
          %788 = vrot.lane.b32.xlu0 %v783, 127
          %v789 = vpop.permute.xlu0 %788
          %v792 = vadd.f32 %v778, %v787
          %v793 = vadd.f32 %v779, %v789
          %s794 = sld [smem:[#allocation6 + $0x2e]]
          %v795 = vstv %s794
          %v796 = vmul.f32 %v795, %v766
          %v797 = vmul.f32 %v795, %v767
          %800 = vrot.lane.b32.xlu0 %v796, 127
          %v801 = vpop.permute.xlu0 %800
          %802 = vrot.lane.b32.xlu0 %v797, 127
          %v803 = vpop.permute.xlu0 %802
          %v806 = vadd.f32 %v792, %v801
          %v807 = vadd.f32 %v793, %v803
          %s808 = sld [smem:[#allocation6 + $0x16]]
          %v809 = vstv %s808
          %v810 = vmul.f32 %v809, %v764
          %v811 = vmul.f32 %v809, %v765
          %814 = vrot.lane.b32.xlu0 %v810, 126
          %v815 = vpop.permute.xlu0 %814
          %816 = vrot.lane.b32.xlu0 %v811, 126
          %v817 = vpop.permute.xlu0 %816
          %v820 = vadd.f32 %v806, %v815
          %v821 = vadd.f32 %v807, %v817
          %s822 = sld [smem:[#allocation6 + $0x2f]]
          %v823 = vstv %s822
          %v824 = vmul.f32 %v823, %v766
          %v825 = vmul.f32 %v823, %v767
          %828 = vrot.lane.b32.xlu0 %v824, 126
          %v829 = vpop.permute.xlu0 %828
          %830 = vrot.lane.b32.xlu0 %v825, 126
          %v831 = vpop.permute.xlu0 %830
          %v834 = vadd.f32 %v820, %v829
          %v835 = vadd.f32 %v821, %v831
          %s836 = sld [smem:[#allocation6 + $0x17]]
          %v837 = vstv %s836
          %v838 = vmul.f32 %v837, %v764
          %v839 = vmul.f32 %v837, %v765
          %842 = vrot.lane.b32.xlu0 %v838, 125
          %v843 = vpop.permute.xlu0 %842
          %844 = vrot.lane.b32.xlu0 %v839, 125
          %v845 = vpop.permute.xlu0 %844
          %v848 = vadd.f32 %v834, %v843
          %v849 = vadd.f32 %v835, %v845
          %s850 = sld [smem:[#allocation6 + $0x30]]
          %v851 = vstv %s850
          %v852 = vmul.f32 %v851, %v766
          %v853 = vmul.f32 %v851, %v767
          %856 = vrot.lane.b32.xlu0 %v852, 125
          %v857 = vpop.permute.xlu0 %856
          %858 = vrot.lane.b32.xlu0 %v853, 125
          %v859 = vpop.permute.xlu0 %858
          %v862 = vadd.f32 %v848, %v857
          %v863 = vadd.f32 %v849, %v859
          %s864 = sld [smem:[#allocation6 + $0x18]]
          %v865 = vstv %s864
          %v866 = vmul.f32 %v865, %v764
          %v867 = vmul.f32 %v865, %v765
          %870 = vrot.lane.b32.xlu0 %v866, 124
          %v871 = vpop.permute.xlu0 %870
          %872 = vrot.lane.b32.xlu0 %v867, 124
          %v873 = vpop.permute.xlu0 %872
          %v876 = vadd.f32 %v862, %v871
          %v877 = vadd.f32 %v863, %v873
          %s878 = sld [smem:[#allocation6 + $0x31]]
          %v879 = vstv %s878
          %v880 = vmul.f32 %v879, %v766
          %v881 = vmul.f32 %v879, %v767
          %884 = vrot.lane.b32.xlu0 %v880, 124
          %v885 = vpop.permute.xlu0 %884
          %886 = vrot.lane.b32.xlu0 %v881, 124
          %v887 = vpop.permute.xlu0 %886
          %v890 = vadd.f32 %v876, %v885
          %v891 = vadd.f32 %v877, %v887
          %v892 = vxor.u32 %v890, 2147483648
          %v893 = vxor.u32 %v891, 2147483648
          %v894 = vmul.f32 %v892, 1.442695
          %v895 = vpow.pop %v894
          %v896 = vmul.f32 %v893, 1.442695
          %v897 = vpow.pop %v896
          %v898 = vadd.f32 %v895, 1.0
          %v899 = vadd.f32 %v897, 1.0
          %v900 = vrcp.pop %v898
          %v901 = vmul.f32 1.0, %v900
          %v902 = vrcp.pop %v899
          %v903 = vmul.f32 1.0, %v902
          %904 = vst.msk [vmem:[%s156] sm:$0xff] %vm166, %v901
          %905 = vst.msk [vmem:[%s156 + $0x8] sm:$0xff] %vm166, %v903
        $region36: #{tpu_custom_call.1} parent=23 // pred_fallthru
          _
        %s906 = sand.u32 %s71, 1
        %s907 = scalar_lea.sflag [#allocation9], %s906
        %s908 = sand.u32 %s71, 1
        %s909 = smul.addr %s908, 16
        %s910 = scalar_lea.vmem [#allocation10], %s909
        // Predicated region
        $region37: #{tpu_custom_call.1} parent=23 // pred_check
          %p911 = pneg %p81
        $region38: #{tpu_custom_call.1} parent=23 // pred_check_branch
          %913 = sbr.rel (%p911) target = $region40
        $region39: #{tpu_custom_call.1} parent=23 // pred_region
          %s915 = ssub.s32 256, 256
          %916 = vsyncadd %s907, %s915
          %s917 = smul.addr %s27, 2
          %s918 = smul.addr %s917, 128
          %s919 = scalar_lea.hbm %s2, %s918
          %s920 = sshll.u32 %s910, 4
          %s921 = int_to_ptr.vmem [resolvable:$true] %s920
          %926 = dma.vmem_to_hbm [thread:$0]  %s921, 256, %s919, %s907, 128, 128, 8
        $region40: #{tpu_custom_call.1} parent=23 // pred_fallthru
          _
      $region24: #{tpu_custom_call.1} parent=5 // pred_fallthru
        _
      %p927 = scmp.le.s32.totalorder 2, %s18
      // Predicated region
      $region41: #{tpu_custom_call.1} parent=5 // pred_check
        %p928 = pneg %p927
      $region42: #{tpu_custom_call.1} parent=5 // pred_check_branch
        %930 = sbr.rel (%p928) target = $region44
      $region43: #{tpu_custom_call.1} parent=5 // pred_region
        %s931 = ssub.s32 %s18, 2
        // Predicated region
        $region45: #{tpu_custom_call.1} parent=43 // pred_check
          %p932 = pneg %p87
        $region46: #{tpu_custom_call.1} parent=43 // pred_check_branch
          %934 = sbr.rel (%p932) target = $region48
        $region47: #{tpu_custom_call.1} parent=43 // pred_region
          %s935 = sand.u32 %s72, 1
          %s936 = scalar_lea.sflag [#allocation9], %s935
          %s937 = sand.u32 %s72, 1
          %s938 = smul.addr %s937, 16
          %s939 = scalar_lea.vmem [#allocation10], %s938
          %940 = dma.done %s936, 256
        $region48: #{tpu_custom_call.1} parent=43 // pred_fallthru
          _
      $region44: #{tpu_custom_call.1} parent=5 // pred_fallthru
        _
    $region6: #{tpu_custom_call.1} parent=1 // loop_footer
      %s22 = sadd.s32 1, %s18
    $region7: #{tpu_custom_call.1} parent=1 // loop_footer_branch
      %17 = sbr.rel target = $region3
    $region8: #{tpu_custom_call.1} parent=1 // loop_exit
      _
    %941 = vsyncpa [#allocation8], 1
    %s942 = scalar_lea.sflag [#allocation8], 1
    %943 = vsyncpa %s942, 1
    %944 = vsyncpa [#allocation9], 1
    %s945 = scalar_lea.sflag [#allocation9], 1
    %946 = vsyncpa %s945, 1

</llo_original>
